<compile_context>
chip_gen: v7x
topology: tpu7x:2x2x1
jax: 0.10.0
libtpu: 0.0.40
codegen_flags: <defaults>
</compile_context>

<pallas_src>
import functools

import jax
import jax.numpy as jnp
from jax import lax
from jax.experimental import pallas as pl
from jax.experimental.pallas import tpu as pltpu

K = 4  # self.count
_INT32_MIN = -(2 ** 31)


def _round_up(x, m):
    return (x + m - 1) // m * m


def _device_kind():
    try:
        return jax.devices()[0].device_kind.lower()
    except Exception:
        return ""


def _choose_tile_r(R, N, itemsize, is_v7x):
    """Sublane-aligned row tile sized against the kernel's real live-VMEM footprint."""
    sub = max(8, 32 // itemsize)  # sublane multiple: 8 for f32, 16 for bf16, 32 for int8
    # Live VMEM per row: double-buffered input block + int32 key copy + ~2 temporaries.
    bytes_per_row = N * (2 * itemsize + 3 * 4)
    budget = (12 << 20) if is_v7x else (32 << 20)  # v7x has 64 MiB VMEM; v5e/v6e 128 MiB
    cap = max(sub, (budget // bytes_per_row) // sub * sub)
    tile = min(cap, _round_up(R, sub), 4096)
    if is_v7x:
        # 2 TensorCores: aim for >= 2 "parallel" grid steps per core when rows allow,
        # so each core keeps its own prefetch/writeback overlap.
        target = 4 if R >= 4 * sub else (2 if R >= 2 * sub else 1)
        tile = min(tile, max(sub, _round_up(pl.cdiv(R, target), sub)))
    return tile
    # TODO(synk): add an N-tiled ("arbitrary" column-block) path with a running
    # (tile_r, k) top-k merge in VMEM scratch for very wide rows.


def _topk_kernel(x_ref, *out_refs, k, merged):
    # x_ref: (tile_r, N); outputs either one (tile_r, 2k) int32 ref (merged) or
    # (tile_r, k) values + (tile_r, k) int32 indices.
    xv = x_ref[...]
    y = xv + xv  # tensor + tensor in the input dtype (exact torch semantics, incl. overflow)
    r, n = y.shape
    neg = jnp.int32(_INT32_MIN)

    if jnp.issubdtype(y.dtype, jnp.floating):
        # Monotone int32 key: signed int compare on `key` == total order on the floats
        # (-NaN < -inf < negatives < -0 < +0 < positives < +inf < +NaN).
        bits = pltpu.bitcast(y.astype(jnp.float32), jnp.int32)
        key = jnp.where(bits < 0, jnp.invert(bits) ^ neg, bits)
        float_path = True
    else:
        key = y.astype(jnp.int32)
        float_path = False

    col = lax.broadcasted_iota(jnp.int32, (1, n), 1)  # (1, N), broadcast in compares

    key_cols, idx_cols = [], []
    # k is small & static: unrolled iterative max-extraction.
    # TODO(synk): for bf16 inputs on v6e/v7x, a 16-bit value key packed with
    # (0xFFFF - col) would fuse the value-max and first-occurrence-index reductions
    # into a single XLU reduce; 32-bit keys leave no room for the index.
    for _ in range(k):
        m = jnp.max(key, axis=-1, keepdims=True)                                  # (r, 1)
        hit = key == m
        idx = jnp.min(jnp.where(hit, col, jnp.int32(n)), axis=-1, keepdims=True)  # first occurrence
        key_cols.append(m)
        idx_cols.append(idx)
        key = jnp.where(col == idx, neg, key)  # knock out the winner (strictly below any finite key)

    mk = jnp.concatenate(key_cols, axis=1)   # (r, k) int32 keys
    idx = jnp.concatenate(idx_cols, axis=1)  # (r, k) int32 indices

    if float_path:
        vbits = jnp.where(mk < 0, jnp.invert(mk ^ neg), mk)  # invert the key mapping
        vals = pltpu.bitcast(vbits, jnp.float32).astype(x_ref.dtype)
    else:
        vals = mk.astype(x_ref.dtype)

    if merged:
        packed_ref, = out_refs
        vals_i32 = vals if vals.dtype == jnp.int32 else pltpu.bitcast(vals, jnp.int32)
        packed_ref[...] = jnp.concatenate([vals_i32, idx], axis=1)
    else:
        vals_ref, idx_ref = out_refs
        vals_ref[...] = vals
        idx_ref[...] = idx


def simple_topk(x, k=K):
    """x: (R, N). Returns (values (R, k) x.dtype, indices (R, k) int32)."""
    R, N = x.shape
    itemsize = jnp.dtype(x.dtype).itemsize
    is_v7x = "v7" in _device_kind()
    tile_r = _choose_tile_r(R, N, itemsize, is_v7x)
    grid = (pl.cdiv(R, tile_r),)  # ragged row tail handled by masked partial block; no jnp.pad

    merged = itemsize == 4  # pack values+indices into one lane-denser int32 output slab
    kernel = functools.partial(_topk_kernel, k=k, merged=merged)

    if merged:
        out_shape = jax.ShapeDtypeStruct((R, 2 * k), jnp.int32)
        out_specs = pl.BlockSpec((tile_r, 2 * k), lambda i: (i, 0))
    else:
        out_shape = (jax.ShapeDtypeStruct((R, k), x.dtype),
                     jax.ShapeDtypeStruct((R, k), jnp.int32))
        out_specs = (pl.BlockSpec((tile_r, k), lambda i: (i, 0)),
                     pl.BlockSpec((tile_r, k), lambda i: (i, 0)))

    out = pl.pallas_call(
        kernel,
        out_shape=out_shape,
        grid_spec=pltpu.PrefetchScalarGridSpec(
            num_scalar_prefetch=0,
            grid=grid,
            in_specs=[pl.BlockSpec((tile_r, N), lambda i: (i, 0))],
            out_specs=out_specs,
        ),
        compiler_params=pltpu.CompilerParams(
            dimension_semantics=("parallel",),
            vmem_limit_bytes=(32 << 20) if is_v7x else (64 << 20),
        ),
    )(x)

    if merged:
        vals = lax.bitcast_convert_type(out[:, :k], x.dtype)
        idx = out[:, k:]
    else:
        vals, idx = out
    # TODO(synk): torch.topk returns int64 indices; TPU kernel emits int32.
    return vals, idx


def _reference_topk(x, k=K):
    y = x + x
    vals, idx = lax.top_k(y, k)
    return vals, idx.astype(jnp.int32)


if __name__ == "__main__":
    key = jax.random.PRNGKey(0)
    # Small shape consistent with the module: batch of rows, top-k over last dim.
    x = jax.random.normal(key, (64, 128), dtype=jnp.float32)

    vals, idx = simple_topk(x, K)
    vals, idx = jax.block_until_ready((vals, idx))

    ref_vals, ref_idx = _reference_topk(x, K)
    assert vals.shape == (64, K) and idx.shape == (64, K)
    assert vals.dtype == x.dtype and idx.dtype == jnp.int32
    assert jnp.allclose(vals, ref_vals, atol=1e-6, rtol=0), "values mismatch"
    assert jnp.array_equal(idx, ref_idx), "indices mismatch"

    print("KERNEL_OK")
</pallas_src>

<mosaic_0001>
module attributes {stable_mosaic.version = 11 : i64} {
  func.func @_topk_kernel(%arg0: i32, %arg1: memref<64x128xf32, #tpu.memory_space<vmem>>, %arg2: memref<64x8xi32, #tpu.memory_space<vmem>>) attributes {dimension_semantics = [#tpu.dimension_semantics<parallel>], iteration_bounds = array<i64: 1>, scalar_prefetch = 0 : i64, scratch_operands = 0 : i64, tpu.core_type = #tpu.core_type<tc>, window_params = [{transform_indices = @transform_0, window_bounds = array<i64: 64, 128>}, {transform_indices = @transform_1, window_bounds = array<i64: 64, 8>}]} {
    %c0 = arith.constant 0 : index
    %c0_0 = arith.constant 0 : index
    %0 = vector.load %arg1[%c0, %c0_0] : memref<64x128xf32, #tpu.memory_space<vmem>>, vector<64x128xf32>
    %1 = arith.addf %0, %0 : vector<64x128xf32>
    %2 = tpu.bitcast %1 : vector<64x128xf32> -> vector<64x128xi32>
    %c0_i32 = arith.constant 0 : i32
    %3 = vector.broadcast %c0_i32 : i32 to vector<64x128xi32>
    %4 = arith.cmpi slt, %2, %3 : vector<64x128xi32>
    %cst = arith.constant dense<-1> : vector<64x128xi32>
    %5 = arith.xori %2, %cst : vector<64x128xi32>
    %c-2147483648_i32 = arith.constant -2147483648 : i32
    %6 = vector.broadcast %c-2147483648_i32 : i32 to vector<64x128xi32>
    %7 = arith.xori %5, %6 : vector<64x128xi32>
    %8 = arith.select %4, %7, %2 : vector<64x128xi1>, vector<64x128xi32>
    %9 = tpu.iota {dimensions = array<i32: 1>} : vector<1x128xi32>
    %cst_1 = arith.constant dense<-2147483648> : vector<64xi32>
    %10 = vector.multi_reduction <maxsi>, %8, %cst_1 [1] : vector<64x128xi32> to vector<64xi32>
    %11 = vector.shape_cast %10 : vector<64xi32> to vector<64x1xi32>
    %12 = vector.broadcast %11 : vector<64x1xi32> to vector<64x128xi32>
    %13 = arith.cmpi eq, %8, %12 : vector<64x128xi32>
    %c128_i32 = arith.constant 128 : i32
    %14 = vector.shape_cast %9 : vector<1x128xi32> to vector<1x128xi32>
    %15 = vector.broadcast %14 : vector<1x128xi32> to vector<64x128xi32>
    %16 = vector.broadcast %c128_i32 : i32 to vector<64x128xi32>
    %17 = arith.select %13, %15, %16 : vector<64x128xi1>, vector<64x128xi32>
    %cst_2 = arith.constant dense<2147483647> : vector<64xi32>
    %18 = vector.multi_reduction <minsi>, %17, %cst_2 [1] : vector<64x128xi32> to vector<64xi32>
    %19 = vector.shape_cast %18 : vector<64xi32> to vector<64x1xi32>
    %20 = vector.broadcast %9 : vector<1x128xi32> to vector<64x128xi32>
    %21 = vector.broadcast %19 : vector<64x1xi32> to vector<64x128xi32>
    %22 = arith.cmpi eq, %20, %21 : vector<64x128xi32>
    %c-2147483648_i32_3 = arith.constant -2147483648 : i32
    %23 = vector.broadcast %c-2147483648_i32_3 : i32 to vector<64x128xi32>
    %24 = arith.select %22, %23, %8 : vector<64x128xi1>, vector<64x128xi32>
    %cst_4 = arith.constant dense<-2147483648> : vector<64xi32>
    %25 = vector.multi_reduction <maxsi>, %24, %cst_4 [1] : vector<64x128xi32> to vector<64xi32>
    %26 = vector.shape_cast %25 : vector<64xi32> to vector<64x1xi32>
    %27 = vector.broadcast %26 : vector<64x1xi32> to vector<64x128xi32>
    %28 = arith.cmpi eq, %24, %27 : vector<64x128xi32>
    %c128_i32_5 = arith.constant 128 : i32
    %29 = vector.shape_cast %9 : vector<1x128xi32> to vector<1x128xi32>
    %30 = vector.broadcast %29 : vector<1x128xi32> to vector<64x128xi32>
    %31 = vector.broadcast %c128_i32_5 : i32 to vector<64x128xi32>
    %32 = arith.select %28, %30, %31 : vector<64x128xi1>, vector<64x128xi32>
    %cst_6 = arith.constant dense<2147483647> : vector<64xi32>
    %33 = vector.multi_reduction <minsi>, %32, %cst_6 [1] : vector<64x128xi32> to vector<64xi32>
    %34 = vector.shape_cast %33 : vector<64xi32> to vector<64x1xi32>
    %35 = vector.broadcast %9 : vector<1x128xi32> to vector<64x128xi32>
    %36 = vector.broadcast %34 : vector<64x1xi32> to vector<64x128xi32>
    %37 = arith.cmpi eq, %35, %36 : vector<64x128xi32>
    %c-2147483648_i32_7 = arith.constant -2147483648 : i32
    %38 = vector.broadcast %c-2147483648_i32_7 : i32 to vector<64x128xi32>
    %39 = arith.select %37, %38, %24 : vector<64x128xi1>, vector<64x128xi32>
    %cst_8 = arith.constant dense<-2147483648> : vector<64xi32>
    %40 = vector.multi_reduction <maxsi>, %39, %cst_8 [1] : vector<64x128xi32> to vector<64xi32>
    %41 = vector.shape_cast %40 : vector<64xi32> to vector<64x1xi32>
    %42 = vector.broadcast %41 : vector<64x1xi32> to vector<64x128xi32>
    %43 = arith.cmpi eq, %39, %42 : vector<64x128xi32>
    %c128_i32_9 = arith.constant 128 : i32
    %44 = vector.shape_cast %9 : vector<1x128xi32> to vector<1x128xi32>
    %45 = vector.broadcast %44 : vector<1x128xi32> to vector<64x128xi32>
    %46 = vector.broadcast %c128_i32_9 : i32 to vector<64x128xi32>
    %47 = arith.select %43, %45, %46 : vector<64x128xi1>, vector<64x128xi32>
    %cst_10 = arith.constant dense<2147483647> : vector<64xi32>
    %48 = vector.multi_reduction <minsi>, %47, %cst_10 [1] : vector<64x128xi32> to vector<64xi32>
    %49 = vector.shape_cast %48 : vector<64xi32> to vector<64x1xi32>
    %50 = vector.broadcast %9 : vector<1x128xi32> to vector<64x128xi32>
    %51 = vector.broadcast %49 : vector<64x1xi32> to vector<64x128xi32>
    %52 = arith.cmpi eq, %50, %51 : vector<64x128xi32>
    %c-2147483648_i32_11 = arith.constant -2147483648 : i32
    %53 = vector.broadcast %c-2147483648_i32_11 : i32 to vector<64x128xi32>
    %54 = arith.select %52, %53, %39 : vector<64x128xi1>, vector<64x128xi32>
    %cst_12 = arith.constant dense<-2147483648> : vector<64xi32>
    %55 = vector.multi_reduction <maxsi>, %54, %cst_12 [1] : vector<64x128xi32> to vector<64xi32>
    %56 = vector.shape_cast %55 : vector<64xi32> to vector<64x1xi32>
    %57 = vector.broadcast %56 : vector<64x1xi32> to vector<64x128xi32>
    %58 = arith.cmpi eq, %54, %57 : vector<64x128xi32>
    %c128_i32_13 = arith.constant 128 : i32
    %59 = vector.shape_cast %9 : vector<1x128xi32> to vector<1x128xi32>
    %60 = vector.broadcast %59 : vector<1x128xi32> to vector<64x128xi32>
    %61 = vector.broadcast %c128_i32_13 : i32 to vector<64x128xi32>
    %62 = arith.select %58, %60, %61 : vector<64x128xi1>, vector<64x128xi32>
    %cst_14 = arith.constant dense<2147483647> : vector<64xi32>
    %63 = vector.multi_reduction <minsi>, %62, %cst_14 [1] : vector<64x128xi32> to vector<64xi32>
    %64 = vector.shape_cast %63 : vector<64xi32> to vector<64x1xi32>
    %65 = tpu.concatenate %11, %26, %41, %56 in 1 : vector<64x1xi32>, vector<64x1xi32>, vector<64x1xi32>, vector<64x1xi32> -> vector<64x4xi32>
    %66 = tpu.concatenate %19, %34, %49, %64 in 1 : vector<64x1xi32>, vector<64x1xi32>, vector<64x1xi32>, vector<64x1xi32> -> vector<64x4xi32>
    %c0_i32_15 = arith.constant 0 : i32
    %67 = vector.broadcast %c0_i32_15 : i32 to vector<64x4xi32>
    %68 = arith.cmpi slt, %65, %67 : vector<64x4xi32>
    %c-2147483648_i32_16 = arith.constant -2147483648 : i32
    %69 = vector.broadcast %c-2147483648_i32_16 : i32 to vector<64x4xi32>
    %70 = arith.xori %65, %69 : vector<64x4xi32>
    %cst_17 = arith.constant dense<-1> : vector<64x4xi32>
    %71 = arith.xori %70, %cst_17 : vector<64x4xi32>
    %72 = arith.select %68, %71, %65 : vector<64x4xi1>, vector<64x4xi32>
    %73 = tpu.bitcast %72 : vector<64x4xi32> -> vector<64x4xf32>
    %74 = tpu.bitcast %73 : vector<64x4xf32> -> vector<64x4xi32>
    %75 = tpu.concatenate %74, %66 in 1 : vector<64x4xi32>, vector<64x4xi32> -> vector<64x8xi32>
    %c0_18 = arith.constant 0 : index
    %c0_19 = arith.constant 0 : index
    %76 = vector.load %arg2[%c0_18, %c0_19] : memref<64x8xi32, #tpu.memory_space<vmem>>, vector<64x8xi32>
    tpu.vector_store %arg2[%c0_18, %c0_19], %75 {strides = array<i32>} : memref<64x8xi32, #tpu.memory_space<vmem>>, vector<64x8xi32>,
    return
  }
  func.func @transform_0(%arg0: i32) -> (i32, i32) {
    %c0_i32 = arith.constant 0 : i32
    %c0_i32_0 = arith.constant 0 : i32
    return %arg0, %c0_i32 : i32, i32
  }
  func.func @transform_1(%arg0: i32) -> (i32, i32) {
    %c0_i32 = arith.constant 0 : i32
    %c0_i32_0 = arith.constant 0 : i32
    return %arg0, %c0_i32 : i32, i32
  }
}

</mosaic_0001>

<llo_original>
// kernel: tpu_custom_call.1
$region0: #{tpu_custom_call.1}
  #allocation0 [shape = 'u32[]', space=smem, size = 0x4, offset = 0x4, fixed_abs, tag = 'smem constant byte address 0x4 - core index']
  #allocation1 [shape = 'u32[144,128]{1,0:T(1,128)}', space=vmem, size = 0x12000, scoped, tag = 'internal scratch']
  %s0 = inlined_call_operand.hbm [shape: f32[64,128], index: 0, kind: input, shape index: {}]
  %s1 = inlined_call_operand.hbm [shape: s32[64,8], index: 1, kind: output, shape index: {}]
  %s2 = sld [smem:[#allocation0]]
  $region18: #{tpu_custom_call.1} parent=0
    _
  %s4 = ssub.s32 1, %s2
  %s5 = scalar_select 0, %s4, %s2
  $region1: #{tpu_custom_call.1} parent=0
    #allocation2 [shape = 'u8[32768]{0}', space=vmem, size = 0x8000, scoped, tag = 'input window, operand 0, single buffered']
    #allocation3 [shape = 's32[1]{0}', space=sflag, size = 0x4, scoped, tag = 'scoped memory for tpu_custom_call.1']
    #allocation4 [shape = 's32[1]{0}', space=sflag, size = 0x4, scoped, tag = 'scoped memory for tpu_custom_call.1']
    #allocation5 [shape = 'u8[32768]{0}', space=vmem, size = 0x8000, scoped, tag = 'output window, operand 0, single buffered']
    %6 = vsyncpa [#allocation3], 0
    %7 = vsyncpa [#allocation4], 0
    // Predicated region
    $region2: #{tpu_custom_call.1} parent=1 // pred_check
      _
    $region3: #{tpu_custom_call.1} parent=1 // pred_check_branch
      %9 = sbr.rel (0) target = $region5
    $region4: #{tpu_custom_call.1} parent=1 // pred_region
      %s11 = ssub.s32 1024, 1024
      %12 = vsyncadd [#allocation3], %s11
      %s13 = sshll.u32 [#allocation2], 4
      %s14 = int_to_ptr.vmem [resolvable:$true] %s13
      %19 = dma.hbm_to_vmem [thread:$0]  %s0, 1024, %s14, [#allocation3], 128, 128, 8
    $region5: #{tpu_custom_call.1} parent=1 // pred_fallthru
      _
    // Predicated region
    $region6: #{tpu_custom_call.1} parent=1 // pred_check
      _
    $region7: #{tpu_custom_call.1} parent=1 // pred_check_branch
      %21 = sbr.rel (0) target = $region9
    $region8: #{tpu_custom_call.1} parent=1 // pred_region
      %22 = dma.done [#allocation3], 1024
    $region9: #{tpu_custom_call.1} parent=1 // pred_fallthru
      _
    %v23 = vld [vmem:[#allocation2] sm:$0xff]
    %v24 = vld [vmem:[#allocation2 + $0x8] sm:$0xff]
    %v25 = vld [vmem:[#allocation2 + $0x10] sm:$0xff]
    %v26 = vld [vmem:[#allocation2 + $0x18] sm:$0xff]
    %v27 = vld [vmem:[#allocation2 + $0x20] sm:$0xff]
    %v28 = vld [vmem:[#allocation2 + $0x28] sm:$0xff]
    %v29 = vld [vmem:[#allocation2 + $0x30] sm:$0xff]
    %v30 = vld [vmem:[#allocation2 + $0x38] sm:$0xff]
    %v31 = vadd.f32 %v23, %v23
    %v32 = vadd.f32 %v24, %v24
    %v33 = vadd.f32 %v25, %v25
    %v34 = vadd.f32 %v26, %v26
    %v35 = vadd.f32 %v27, %v27
    %v36 = vadd.f32 %v28, %v28
    %v37 = vadd.f32 %v29, %v29
    %v38 = vadd.f32 %v30, %v30
    %vm47 = vcmp.lt.s32.totalorder %v31, 0
    %vm48 = vcmp.lt.s32.totalorder %v32, 0
    %vm49 = vcmp.lt.s32.totalorder %v33, 0
    %vm50 = vcmp.lt.s32.totalorder %v34, 0
    %vm51 = vcmp.lt.s32.totalorder %v35, 0
    %vm52 = vcmp.lt.s32.totalorder %v36, 0
    %vm53 = vcmp.lt.s32.totalorder %v37, 0
    %vm54 = vcmp.lt.s32.totalorder %v38, 0
    %v55 = vxor.u32 %v31, 4294967295
    %v56 = vxor.u32 %v32, 4294967295
    %v57 = vxor.u32 %v33, 4294967295
    %v58 = vxor.u32 %v34, 4294967295
    %v59 = vxor.u32 %v35, 4294967295
    %v60 = vxor.u32 %v36, 4294967295
    %v61 = vxor.u32 %v37, 4294967295
    %v62 = vxor.u32 %v38, 4294967295
    %v63 = vxor.u32 %v55, 2147483648
    %v64 = vxor.u32 %v56, 2147483648
    %v65 = vxor.u32 %v57, 2147483648
    %v66 = vxor.u32 %v58, 2147483648
    %v67 = vxor.u32 %v59, 2147483648
    %v68 = vxor.u32 %v60, 2147483648
    %v69 = vxor.u32 %v61, 2147483648
    %v70 = vxor.u32 %v62, 2147483648
    %v71 = vsel %vm47, %v63, %v31
    %v72 = vsel %vm48, %v64, %v32
    %v73 = vsel %vm49, %v65, %v33
    %v74 = vsel %vm50, %v66, %v34
    %v75 = vsel %vm51, %v67, %v35
    %v76 = vsel %vm52, %v68, %v36
    %v77 = vsel %vm53, %v69, %v37
    %v78 = vsel %vm54, %v70, %v38
    %v79 = vlaneseq
    %v80 = vand.u32 %v79, 127
    %v81 = vand.u32 %v71, 65535
    %v82 = vshra.s32 %v71, 16
    %v83 = vcvt.s32.f32 %v81
    %v84 = vcvt.s32.f32 %v82
    %85 = vmax.xlane.f32.xlu0 %v84
    %v86 = vpop.xlane.xlu0 %85
    %vm87 = vcmp.eq.f32.partialorder %v84, %v86
    %v88 = vsel %vm87, %v83, -inf
    %89 = vmax.xlane.f32.xlu0 %v88
    %v90 = vpop.xlane.xlu0 %89
    %v91 = vcvt.f32.s32 %v90
    %v92 = vcvt.f32.s32 %v86
    %v93 = vshll.u32 %v92, 16
    %v94 = vadd.s32 %v93, %v91
    %v95 = vand.u32 %v72, 65535
    %v96 = vshra.s32 %v72, 16
    %v97 = vcvt.s32.f32 %v95
    %v98 = vcvt.s32.f32 %v96
    %99 = vmax.xlane.f32.xlu0 %v98
    %v100 = vpop.xlane.xlu0 %99
    %vm101 = vcmp.eq.f32.partialorder %v98, %v100
    %v102 = vsel %vm101, %v97, -inf
    %103 = vmax.xlane.f32.xlu0 %v102
    %v104 = vpop.xlane.xlu0 %103
    %v105 = vcvt.f32.s32 %v104
    %v106 = vcvt.f32.s32 %v100
    %v107 = vshll.u32 %v106, 16
    %v108 = vadd.s32 %v107, %v105
    %v109 = vand.u32 %v73, 65535
    %v110 = vshra.s32 %v73, 16
    %v111 = vcvt.s32.f32 %v109
    %v112 = vcvt.s32.f32 %v110
    %113 = vmax.xlane.f32.xlu0 %v112
    %v114 = vpop.xlane.xlu0 %113
    %vm115 = vcmp.eq.f32.partialorder %v112, %v114
    %v116 = vsel %vm115, %v111, -inf
    %117 = vmax.xlane.f32.xlu0 %v116
    %v118 = vpop.xlane.xlu0 %117
    %v119 = vcvt.f32.s32 %v118
    %v120 = vcvt.f32.s32 %v114
    %v121 = vshll.u32 %v120, 16
    %v122 = vadd.s32 %v121, %v119
    %v123 = vand.u32 %v74, 65535
    %v124 = vshra.s32 %v74, 16
    %v125 = vcvt.s32.f32 %v123
    %v126 = vcvt.s32.f32 %v124
    %127 = vmax.xlane.f32.xlu0 %v126
    %v128 = vpop.xlane.xlu0 %127
    %vm129 = vcmp.eq.f32.partialorder %v126, %v128
    %v130 = vsel %vm129, %v125, -inf
    %131 = vmax.xlane.f32.xlu0 %v130
    %v132 = vpop.xlane.xlu0 %131
    %v133 = vcvt.f32.s32 %v132
    %v134 = vcvt.f32.s32 %v128
    %v135 = vshll.u32 %v134, 16
    %v136 = vadd.s32 %v135, %v133
    %v137 = vand.u32 %v75, 65535
    %v138 = vshra.s32 %v75, 16
    %v139 = vcvt.s32.f32 %v137
    %v140 = vcvt.s32.f32 %v138
    %141 = vmax.xlane.f32.xlu0 %v140
    %v142 = vpop.xlane.xlu0 %141
    %vm143 = vcmp.eq.f32.partialorder %v140, %v142
    %v144 = vsel %vm143, %v139, -inf
    %145 = vmax.xlane.f32.xlu0 %v144
    %v146 = vpop.xlane.xlu0 %145
    %v147 = vcvt.f32.s32 %v146
    %v148 = vcvt.f32.s32 %v142
    %v149 = vshll.u32 %v148, 16
    %v150 = vadd.s32 %v149, %v147
    %v151 = vand.u32 %v76, 65535
    %v152 = vshra.s32 %v76, 16
    %v153 = vcvt.s32.f32 %v151
    %v154 = vcvt.s32.f32 %v152
    %155 = vmax.xlane.f32.xlu0 %v154
    %v156 = vpop.xlane.xlu0 %155
    %vm157 = vcmp.eq.f32.partialorder %v154, %v156
    %v158 = vsel %vm157, %v153, -inf
    %159 = vmax.xlane.f32.xlu0 %v158
    %v160 = vpop.xlane.xlu0 %159
    %v161 = vcvt.f32.s32 %v160
    %v162 = vcvt.f32.s32 %v156
    %v163 = vshll.u32 %v162, 16
    %v164 = vadd.s32 %v163, %v161
    %v165 = vand.u32 %v77, 65535
    %v166 = vshra.s32 %v77, 16
    %v167 = vcvt.s32.f32 %v165
    %v168 = vcvt.s32.f32 %v166
    %169 = vmax.xlane.f32.xlu0 %v168
    %v170 = vpop.xlane.xlu0 %169
    %vm171 = vcmp.eq.f32.partialorder %v168, %v170
    %v172 = vsel %vm171, %v167, -inf
    %173 = vmax.xlane.f32.xlu0 %v172
    %v174 = vpop.xlane.xlu0 %173
    %v175 = vcvt.f32.s32 %v174
    %v176 = vcvt.f32.s32 %v170
    %v177 = vshll.u32 %v176, 16
    %v178 = vadd.s32 %v177, %v175
    %v179 = vand.u32 %v78, 65535
    %v180 = vshra.s32 %v78, 16
    %v181 = vcvt.s32.f32 %v179
    %v182 = vcvt.s32.f32 %v180
    %183 = vmax.xlane.f32.xlu0 %v182
    %v184 = vpop.xlane.xlu0 %183
    %vm185 = vcmp.eq.f32.partialorder %v182, %v184
    %v186 = vsel %vm185, %v181, -inf
    %187 = vmax.xlane.f32.xlu0 %v186
    %v188 = vpop.xlane.xlu0 %187
    %v189 = vcvt.f32.s32 %v188
    %v190 = vcvt.f32.s32 %v184
    %v191 = vshll.u32 %v190, 16
    %v192 = vadd.s32 %v191, %v189
    %vm193 = vcmp.eq.s32.totalorder %v71, %v94
    %vm194 = vcmp.eq.s32.totalorder %v72, %v108
    %vm195 = vcmp.eq.s32.totalorder %v73, %v122
    %vm196 = vcmp.eq.s32.totalorder %v74, %v136
    %vm197 = vcmp.eq.s32.totalorder %v75, %v150
    %vm198 = vcmp.eq.s32.totalorder %v76, %v164
    %vm199 = vcmp.eq.s32.totalorder %v77, %v178
    %vm200 = vcmp.eq.s32.totalorder %v78, %v192
    %v201 = vsel %vm193, %v80, 128
    %v202 = vsel %vm194, %v80, 128
    %v203 = vsel %vm195, %v80, 128
    %v204 = vsel %vm196, %v80, 128
    %v205 = vsel %vm197, %v80, 128
    %v206 = vsel %vm198, %v80, 128
    %v207 = vsel %vm199, %v80, 128
    %v208 = vsel %vm200, %v80, 128
    %v209 = vand.u32 %v201, 65535
    %v210 = vshra.s32 %v201, 16
    %v211 = vcvt.s32.f32 %v209
    %v212 = vcvt.s32.f32 %v210
    %213 = vmin.xlane.f32.xlu0 %v212
    %v214 = vpop.xlane.xlu0 %213
    %vm215 = vcmp.eq.f32.partialorder %v212, %v214
    %v216 = vsel %vm215, %v211, inf
    %217 = vmin.xlane.f32.xlu0 %v216
    %v218 = vpop.xlane.xlu0 %217
    %v219 = vcvt.f32.s32 %v218
    %v220 = vcvt.f32.s32 %v214
    %v221 = vshll.u32 %v220, 16
    %v222 = vadd.s32 %v221, %v219
    %v223 = vand.u32 %v202, 65535
    %v224 = vshra.s32 %v202, 16
    %v225 = vcvt.s32.f32 %v223
    %v226 = vcvt.s32.f32 %v224
    %227 = vmin.xlane.f32.xlu0 %v226
    %v228 = vpop.xlane.xlu0 %227
    %vm229 = vcmp.eq.f32.partialorder %v226, %v228
    %v230 = vsel %vm229, %v225, inf
    %231 = vmin.xlane.f32.xlu0 %v230
    %v232 = vpop.xlane.xlu0 %231
    %v233 = vcvt.f32.s32 %v232
    %v234 = vcvt.f32.s32 %v228
    %v235 = vshll.u32 %v234, 16
    %v236 = vadd.s32 %v235, %v233
    %v237 = vand.u32 %v203, 65535
    %v238 = vshra.s32 %v203, 16
    %v239 = vcvt.s32.f32 %v237
    %v240 = vcvt.s32.f32 %v238
    %241 = vmin.xlane.f32.xlu0 %v240
    %v242 = vpop.xlane.xlu0 %241
    %vm243 = vcmp.eq.f32.partialorder %v240, %v242
    %v244 = vsel %vm243, %v239, inf
    %245 = vmin.xlane.f32.xlu0 %v244
    %v246 = vpop.xlane.xlu0 %245
    %v247 = vcvt.f32.s32 %v246
    %v248 = vcvt.f32.s32 %v242
    %v249 = vshll.u32 %v248, 16
    %v250 = vadd.s32 %v249, %v247
    %v251 = vand.u32 %v204, 65535
    %v252 = vshra.s32 %v204, 16
    %v253 = vcvt.s32.f32 %v251
    %v254 = vcvt.s32.f32 %v252
    %255 = vmin.xlane.f32.xlu0 %v254
    %v256 = vpop.xlane.xlu0 %255
    %vm257 = vcmp.eq.f32.partialorder %v254, %v256
    %v258 = vsel %vm257, %v253, inf
    %259 = vmin.xlane.f32.xlu0 %v258
    %v260 = vpop.xlane.xlu0 %259
    %v261 = vcvt.f32.s32 %v260
    %v262 = vcvt.f32.s32 %v256
    %v263 = vshll.u32 %v262, 16
    %v264 = vadd.s32 %v263, %v261
    %v265 = vand.u32 %v205, 65535
    %v266 = vshra.s32 %v205, 16
    %v267 = vcvt.s32.f32 %v265
    %v268 = vcvt.s32.f32 %v266
    %269 = vmin.xlane.f32.xlu0 %v268
    %v270 = vpop.xlane.xlu0 %269
    %vm271 = vcmp.eq.f32.partialorder %v268, %v270
    %v272 = vsel %vm271, %v267, inf
    %273 = vmin.xlane.f32.xlu0 %v272
    %v274 = vpop.xlane.xlu0 %273
    %v275 = vcvt.f32.s32 %v274
    %v276 = vcvt.f32.s32 %v270
    %v277 = vshll.u32 %v276, 16
    %v278 = vadd.s32 %v277, %v275
    %v279 = vand.u32 %v206, 65535
    %v280 = vshra.s32 %v206, 16
    %v281 = vcvt.s32.f32 %v279
    %v282 = vcvt.s32.f32 %v280
    %283 = vmin.xlane.f32.xlu0 %v282
    %v284 = vpop.xlane.xlu0 %283
    %vm285 = vcmp.eq.f32.partialorder %v282, %v284
    %v286 = vsel %vm285, %v281, inf
    %287 = vmin.xlane.f32.xlu0 %v286
    %v288 = vpop.xlane.xlu0 %287
    %v289 = vcvt.f32.s32 %v288
    %v290 = vcvt.f32.s32 %v284
    %v291 = vshll.u32 %v290, 16
    %v292 = vadd.s32 %v291, %v289
    %v293 = vand.u32 %v207, 65535
    %v294 = vshra.s32 %v207, 16
    %v295 = vcvt.s32.f32 %v293
    %v296 = vcvt.s32.f32 %v294
    %297 = vmin.xlane.f32.xlu0 %v296
    %v298 = vpop.xlane.xlu0 %297
    %vm299 = vcmp.eq.f32.partialorder %v296, %v298
    %v300 = vsel %vm299, %v295, inf
    %301 = vmin.xlane.f32.xlu0 %v300
    %v302 = vpop.xlane.xlu0 %301
    %v303 = vcvt.f32.s32 %v302
    %v304 = vcvt.f32.s32 %v298
    %v305 = vshll.u32 %v304, 16
    %v306 = vadd.s32 %v305, %v303
    %v307 = vand.u32 %v208, 65535
    %v308 = vshra.s32 %v208, 16
    %v309 = vcvt.s32.f32 %v307
    %v310 = vcvt.s32.f32 %v308
    %311 = vmin.xlane.f32.xlu0 %v310
    %v312 = vpop.xlane.xlu0 %311
    %vm313 = vcmp.eq.f32.partialorder %v310, %v312
    %v314 = vsel %vm313, %v309, inf
    %315 = vmin.xlane.f32.xlu0 %v314
    %v316 = vpop.xlane.xlu0 %315
    %v317 = vcvt.f32.s32 %v316
    %v318 = vcvt.f32.s32 %v312
    %v319 = vshll.u32 %v318, 16
    %v320 = vadd.s32 %v319, %v317
    %vm321 = vcmp.eq.s32.totalorder %v80, %v222
    %vm322 = vcmp.eq.s32.totalorder %v80, %v236
    %vm323 = vcmp.eq.s32.totalorder %v80, %v250
    %vm324 = vcmp.eq.s32.totalorder %v80, %v264
    %vm325 = vcmp.eq.s32.totalorder %v80, %v278
    %vm326 = vcmp.eq.s32.totalorder %v80, %v292
    %vm327 = vcmp.eq.s32.totalorder %v80, %v306
    %vm328 = vcmp.eq.s32.totalorder %v80, %v320
    %v329 = vsel %vm321, 2147483648, %v71
    %v330 = vsel %vm322, 2147483648, %v72
    %v331 = vsel %vm323, 2147483648, %v73
    %v332 = vsel %vm324, 2147483648, %v74
    %v333 = vsel %vm325, 2147483648, %v75
    %v334 = vsel %vm326, 2147483648, %v76
    %v335 = vsel %vm327, 2147483648, %v77
    %v336 = vsel %vm328, 2147483648, %v78
    %v337 = vand.u32 %v329, 65535
    %v338 = vshra.s32 %v329, 16
    %v339 = vcvt.s32.f32 %v337
    %v340 = vcvt.s32.f32 %v338
    %341 = vmax.xlane.f32.xlu0 %v340
    %v342 = vpop.xlane.xlu0 %341
    %vm343 = vcmp.eq.f32.partialorder %v340, %v342
    %v344 = vsel %vm343, %v339, -inf
    %345 = vmax.xlane.f32.xlu0 %v344
    %v346 = vpop.xlane.xlu0 %345
    %v347 = vcvt.f32.s32 %v346
    %v348 = vcvt.f32.s32 %v342
    %v349 = vshll.u32 %v348, 16
    %v350 = vadd.s32 %v349, %v347
    %v351 = vand.u32 %v330, 65535
    %v352 = vshra.s32 %v330, 16
    %v353 = vcvt.s32.f32 %v351
    %v354 = vcvt.s32.f32 %v352
    %355 = vmax.xlane.f32.xlu0 %v354
    %v356 = vpop.xlane.xlu0 %355
    %vm357 = vcmp.eq.f32.partialorder %v354, %v356
    %v358 = vsel %vm357, %v353, -inf
    %359 = vmax.xlane.f32.xlu0 %v358
    %v360 = vpop.xlane.xlu0 %359
    %v361 = vcvt.f32.s32 %v360
    %v362 = vcvt.f32.s32 %v356
    %v363 = vshll.u32 %v362, 16
    %v364 = vadd.s32 %v363, %v361
    %v365 = vand.u32 %v331, 65535
    %v366 = vshra.s32 %v331, 16
    %v367 = vcvt.s32.f32 %v365
    %v368 = vcvt.s32.f32 %v366
    %369 = vmax.xlane.f32.xlu0 %v368
    %v370 = vpop.xlane.xlu0 %369
    %vm371 = vcmp.eq.f32.partialorder %v368, %v370
    %v372 = vsel %vm371, %v367, -inf
    %373 = vmax.xlane.f32.xlu0 %v372
    %v374 = vpop.xlane.xlu0 %373
    %v375 = vcvt.f32.s32 %v374
    %v376 = vcvt.f32.s32 %v370
    %v377 = vshll.u32 %v376, 16
    %v378 = vadd.s32 %v377, %v375
    %v379 = vand.u32 %v332, 65535
    %v380 = vshra.s32 %v332, 16
    %v381 = vcvt.s32.f32 %v379
    %v382 = vcvt.s32.f32 %v380
    %383 = vmax.xlane.f32.xlu0 %v382
    %v384 = vpop.xlane.xlu0 %383
    %vm385 = vcmp.eq.f32.partialorder %v382, %v384
    %v386 = vsel %vm385, %v381, -inf
    %387 = vmax.xlane.f32.xlu0 %v386
    %v388 = vpop.xlane.xlu0 %387
    %v389 = vcvt.f32.s32 %v388
    %v390 = vcvt.f32.s32 %v384
    %v391 = vshll.u32 %v390, 16
    %v392 = vadd.s32 %v391, %v389
    %v393 = vand.u32 %v333, 65535
    %v394 = vshra.s32 %v333, 16
    %v395 = vcvt.s32.f32 %v393
    %v396 = vcvt.s32.f32 %v394
    %397 = vmax.xlane.f32.xlu0 %v396
    %v398 = vpop.xlane.xlu0 %397
    %vm399 = vcmp.eq.f32.partialorder %v396, %v398
    %v400 = vsel %vm399, %v395, -inf
    %401 = vmax.xlane.f32.xlu0 %v400
    %v402 = vpop.xlane.xlu0 %401
    %v403 = vcvt.f32.s32 %v402
    %v404 = vcvt.f32.s32 %v398
    %v405 = vshll.u32 %v404, 16
    %v406 = vadd.s32 %v405, %v403
    %v407 = vand.u32 %v334, 65535
    %v408 = vshra.s32 %v334, 16
    %v409 = vcvt.s32.f32 %v407
    %v410 = vcvt.s32.f32 %v408
    %411 = vmax.xlane.f32.xlu0 %v410
    %v412 = vpop.xlane.xlu0 %411
    %vm413 = vcmp.eq.f32.partialorder %v410, %v412
    %v414 = vsel %vm413, %v409, -inf
    %415 = vmax.xlane.f32.xlu0 %v414
    %v416 = vpop.xlane.xlu0 %415
    %v417 = vcvt.f32.s32 %v416
    %v418 = vcvt.f32.s32 %v412
    %v419 = vshll.u32 %v418, 16
    %v420 = vadd.s32 %v419, %v417
    %v421 = vand.u32 %v335, 65535
    %v422 = vshra.s32 %v335, 16
    %v423 = vcvt.s32.f32 %v421
    %v424 = vcvt.s32.f32 %v422
    %425 = vmax.xlane.f32.xlu0 %v424
    %v426 = vpop.xlane.xlu0 %425
    %vm427 = vcmp.eq.f32.partialorder %v424, %v426
    %v428 = vsel %vm427, %v423, -inf
    %429 = vmax.xlane.f32.xlu0 %v428
    %v430 = vpop.xlane.xlu0 %429
    %v431 = vcvt.f32.s32 %v430
    %v432 = vcvt.f32.s32 %v426
    %v433 = vshll.u32 %v432, 16
    %v434 = vadd.s32 %v433, %v431
    %v435 = vand.u32 %v336, 65535
    %v436 = vshra.s32 %v336, 16
    %v437 = vcvt.s32.f32 %v435
    %v438 = vcvt.s32.f32 %v436
    %439 = vmax.xlane.f32.xlu0 %v438
    %v440 = vpop.xlane.xlu0 %439
    %vm441 = vcmp.eq.f32.partialorder %v438, %v440
    %v442 = vsel %vm441, %v437, -inf
    %443 = vmax.xlane.f32.xlu0 %v442
    %v444 = vpop.xlane.xlu0 %443
    %v445 = vcvt.f32.s32 %v444
    %v446 = vcvt.f32.s32 %v440
    %v447 = vshll.u32 %v446, 16
    %v448 = vadd.s32 %v447, %v445
    %vm449 = vcmp.eq.s32.totalorder %v329, %v350
    %vm450 = vcmp.eq.s32.totalorder %v330, %v364
    %vm451 = vcmp.eq.s32.totalorder %v331, %v378
    %vm452 = vcmp.eq.s32.totalorder %v332, %v392
    %vm453 = vcmp.eq.s32.totalorder %v333, %v406
    %vm454 = vcmp.eq.s32.totalorder %v334, %v420
    %vm455 = vcmp.eq.s32.totalorder %v335, %v434
    %vm456 = vcmp.eq.s32.totalorder %v336, %v448
    %v457 = vsel %vm449, %v80, 128
    %v458 = vsel %vm450, %v80, 128
    %v459 = vsel %vm451, %v80, 128
    %v460 = vsel %vm452, %v80, 128
    %v461 = vsel %vm453, %v80, 128
    %v462 = vsel %vm454, %v80, 128
    %v463 = vsel %vm455, %v80, 128
    %v464 = vsel %vm456, %v80, 128
    %v465 = vand.u32 %v457, 65535
    %v466 = vshra.s32 %v457, 16
    %v467 = vcvt.s32.f32 %v465
    %v468 = vcvt.s32.f32 %v466
    %469 = vmin.xlane.f32.xlu0 %v468
    %v470 = vpop.xlane.xlu0 %469
    %vm471 = vcmp.eq.f32.partialorder %v468, %v470
    %v472 = vsel %vm471, %v467, inf
    %473 = vmin.xlane.f32.xlu0 %v472
    %v474 = vpop.xlane.xlu0 %473
    %v475 = vcvt.f32.s32 %v474
    %v476 = vcvt.f32.s32 %v470
    %v477 = vshll.u32 %v476, 16
    %v478 = vadd.s32 %v477, %v475
    %v479 = vand.u32 %v458, 65535
    %v480 = vshra.s32 %v458, 16
    %v481 = vcvt.s32.f32 %v479
    %v482 = vcvt.s32.f32 %v480
    %483 = vmin.xlane.f32.xlu0 %v482
    %v484 = vpop.xlane.xlu0 %483
    %vm485 = vcmp.eq.f32.partialorder %v482, %v484
    %v486 = vsel %vm485, %v481, inf
    %487 = vmin.xlane.f32.xlu0 %v486
    %v488 = vpop.xlane.xlu0 %487
    %v489 = vcvt.f32.s32 %v488
    %v490 = vcvt.f32.s32 %v484
    %v491 = vshll.u32 %v490, 16
    %v492 = vadd.s32 %v491, %v489
    %v493 = vand.u32 %v459, 65535
    %v494 = vshra.s32 %v459, 16
    %v495 = vcvt.s32.f32 %v493
    %v496 = vcvt.s32.f32 %v494
    %497 = vmin.xlane.f32.xlu0 %v496
    %v498 = vpop.xlane.xlu0 %497
    %vm499 = vcmp.eq.f32.partialorder %v496, %v498
    %v500 = vsel %vm499, %v495, inf
    %501 = vmin.xlane.f32.xlu0 %v500
    %v502 = vpop.xlane.xlu0 %501
    %v503 = vcvt.f32.s32 %v502
    %v504 = vcvt.f32.s32 %v498
    %v505 = vshll.u32 %v504, 16
    %v506 = vadd.s32 %v505, %v503
    %v507 = vand.u32 %v460, 65535
    %v508 = vshra.s32 %v460, 16
    %v509 = vcvt.s32.f32 %v507
    %v510 = vcvt.s32.f32 %v508
    %511 = vmin.xlane.f32.xlu0 %v510
    %v512 = vpop.xlane.xlu0 %511
    %vm513 = vcmp.eq.f32.partialorder %v510, %v512
    %v514 = vsel %vm513, %v509, inf
    %515 = vmin.xlane.f32.xlu0 %v514
    %v516 = vpop.xlane.xlu0 %515
    %v517 = vcvt.f32.s32 %v516
    %v518 = vcvt.f32.s32 %v512
    %v519 = vshll.u32 %v518, 16
    %v520 = vadd.s32 %v519, %v517
    %v521 = vand.u32 %v461, 65535
    %v522 = vshra.s32 %v461, 16
    %v523 = vcvt.s32.f32 %v521
    %v524 = vcvt.s32.f32 %v522
    %525 = vmin.xlane.f32.xlu0 %v524
    %v526 = vpop.xlane.xlu0 %525
    %vm527 = vcmp.eq.f32.partialorder %v524, %v526
    %v528 = vsel %vm527, %v523, inf
    %529 = vmin.xlane.f32.xlu0 %v528
    %v530 = vpop.xlane.xlu0 %529
    %v531 = vcvt.f32.s32 %v530
    %v532 = vcvt.f32.s32 %v526
    %v533 = vshll.u32 %v532, 16
    %v534 = vadd.s32 %v533, %v531
    %v535 = vand.u32 %v462, 65535
    %v536 = vshra.s32 %v462, 16
    %v537 = vcvt.s32.f32 %v535
    %v538 = vcvt.s32.f32 %v536
    %539 = vmin.xlane.f32.xlu0 %v538
    %v540 = vpop.xlane.xlu0 %539
    %vm541 = vcmp.eq.f32.partialorder %v538, %v540
    %v542 = vsel %vm541, %v537, inf
    %543 = vmin.xlane.f32.xlu0 %v542
    %v544 = vpop.xlane.xlu0 %543
    %v545 = vcvt.f32.s32 %v544
    %v546 = vcvt.f32.s32 %v540
    %v547 = vshll.u32 %v546, 16
    %v548 = vadd.s32 %v547, %v545
    %v549 = vand.u32 %v463, 65535
    %v550 = vshra.s32 %v463, 16
    %v551 = vcvt.s32.f32 %v549
    %v552 = vcvt.s32.f32 %v550
    %553 = vmin.xlane.f32.xlu0 %v552
    %v554 = vpop.xlane.xlu0 %553
    %vm555 = vcmp.eq.f32.partialorder %v552, %v554
    %v556 = vsel %vm555, %v551, inf
    %557 = vmin.xlane.f32.xlu0 %v556
    %v558 = vpop.xlane.xlu0 %557
    %v559 = vcvt.f32.s32 %v558
    %v560 = vcvt.f32.s32 %v554
    %v561 = vshll.u32 %v560, 16
    %v562 = vadd.s32 %v561, %v559
    %v563 = vand.u32 %v464, 65535
    %v564 = vshra.s32 %v464, 16
    %v565 = vcvt.s32.f32 %v563
    %v566 = vcvt.s32.f32 %v564
    %567 = vmin.xlane.f32.xlu0 %v566
    %v568 = vpop.xlane.xlu0 %567
    %vm569 = vcmp.eq.f32.partialorder %v566, %v568
    %v570 = vsel %vm569, %v565, inf
    %571 = vmin.xlane.f32.xlu0 %v570
    %v572 = vpop.xlane.xlu0 %571
    %v573 = vcvt.f32.s32 %v572
    %v574 = vcvt.f32.s32 %v568
    %v575 = vshll.u32 %v574, 16
    %v576 = vadd.s32 %v575, %v573
    %vm577 = vcmp.eq.s32.totalorder %v80, %v478
    %vm578 = vcmp.eq.s32.totalorder %v80, %v492
    %vm579 = vcmp.eq.s32.totalorder %v80, %v506
    %vm580 = vcmp.eq.s32.totalorder %v80, %v520
    %vm581 = vcmp.eq.s32.totalorder %v80, %v534
    %vm582 = vcmp.eq.s32.totalorder %v80, %v548
    %vm583 = vcmp.eq.s32.totalorder %v80, %v562
    %vm584 = vcmp.eq.s32.totalorder %v80, %v576
    %v585 = vsel %vm577, 2147483648, %v329
    %v586 = vsel %vm578, 2147483648, %v330
    %v587 = vsel %vm579, 2147483648, %v331
    %v588 = vsel %vm580, 2147483648, %v332
    %v589 = vsel %vm581, 2147483648, %v333
    %v590 = vsel %vm582, 2147483648, %v334
    %v591 = vsel %vm583, 2147483648, %v335
    %v592 = vsel %vm584, 2147483648, %v336
    %v593 = vand.u32 %v585, 65535
    %v594 = vshra.s32 %v585, 16
    %v595 = vcvt.s32.f32 %v593
    %v596 = vcvt.s32.f32 %v594
    %597 = vmax.xlane.f32.xlu0 %v596
    %v598 = vpop.xlane.xlu0 %597
    %vm599 = vcmp.eq.f32.partialorder %v596, %v598
    %v600 = vsel %vm599, %v595, -inf
    %601 = vmax.xlane.f32.xlu0 %v600
    %v602 = vpop.xlane.xlu0 %601
    %v603 = vcvt.f32.s32 %v602
    %v604 = vcvt.f32.s32 %v598
    %v605 = vshll.u32 %v604, 16
    %v606 = vadd.s32 %v605, %v603
    %v607 = vand.u32 %v586, 65535
    %v608 = vshra.s32 %v586, 16
    %v609 = vcvt.s32.f32 %v607
    %v610 = vcvt.s32.f32 %v608
    %611 = vmax.xlane.f32.xlu0 %v610
    %v612 = vpop.xlane.xlu0 %611
    %vm613 = vcmp.eq.f32.partialorder %v610, %v612
    %v614 = vsel %vm613, %v609, -inf
    %615 = vmax.xlane.f32.xlu0 %v614
    %v616 = vpop.xlane.xlu0 %615
    %v617 = vcvt.f32.s32 %v616
    %v618 = vcvt.f32.s32 %v612
    %v619 = vshll.u32 %v618, 16
    %v620 = vadd.s32 %v619, %v617
    %v621 = vand.u32 %v587, 65535
    %v622 = vshra.s32 %v587, 16
    %v623 = vcvt.s32.f32 %v621
    %v624 = vcvt.s32.f32 %v622
    %625 = vmax.xlane.f32.xlu0 %v624
    %v626 = vpop.xlane.xlu0 %625
    %vm627 = vcmp.eq.f32.partialorder %v624, %v626
    %v628 = vsel %vm627, %v623, -inf
    %629 = vmax.xlane.f32.xlu0 %v628
    %v630 = vpop.xlane.xlu0 %629
    %v631 = vcvt.f32.s32 %v630
    %v632 = vcvt.f32.s32 %v626
    %v633 = vshll.u32 %v632, 16
    %v634 = vadd.s32 %v633, %v631
    %v635 = vand.u32 %v588, 65535
    %v636 = vshra.s32 %v588, 16
    %v637 = vcvt.s32.f32 %v635
    %v638 = vcvt.s32.f32 %v636
    %639 = vmax.xlane.f32.xlu0 %v638
    %v640 = vpop.xlane.xlu0 %639
    %vm641 = vcmp.eq.f32.partialorder %v638, %v640
    %v642 = vsel %vm641, %v637, -inf
    %643 = vmax.xlane.f32.xlu0 %v642
    %v644 = vpop.xlane.xlu0 %643
    %v645 = vcvt.f32.s32 %v644
    %v646 = vcvt.f32.s32 %v640
    %v647 = vshll.u32 %v646, 16
    %v648 = vadd.s32 %v647, %v645
    %v649 = vand.u32 %v589, 65535
    %v650 = vshra.s32 %v589, 16
    %v651 = vcvt.s32.f32 %v649
    %v652 = vcvt.s32.f32 %v650
    %653 = vmax.xlane.f32.xlu0 %v652
    %v654 = vpop.xlane.xlu0 %653
    %vm655 = vcmp.eq.f32.partialorder %v652, %v654
    %v656 = vsel %vm655, %v651, -inf
    %657 = vmax.xlane.f32.xlu0 %v656
    %v658 = vpop.xlane.xlu0 %657
    %v659 = vcvt.f32.s32 %v658
    %v660 = vcvt.f32.s32 %v654
    %v661 = vshll.u32 %v660, 16
    %v662 = vadd.s32 %v661, %v659
    %v663 = vand.u32 %v590, 65535
    %v664 = vshra.s32 %v590, 16
    %v665 = vcvt.s32.f32 %v663
    %v666 = vcvt.s32.f32 %v664
    %667 = vmax.xlane.f32.xlu0 %v666
    %v668 = vpop.xlane.xlu0 %667
    %vm669 = vcmp.eq.f32.partialorder %v666, %v668
    %v670 = vsel %vm669, %v665, -inf
    %671 = vmax.xlane.f32.xlu0 %v670
    %v672 = vpop.xlane.xlu0 %671
    %v673 = vcvt.f32.s32 %v672
    %v674 = vcvt.f32.s32 %v668
    %v675 = vshll.u32 %v674, 16
    %v676 = vadd.s32 %v675, %v673
    %v677 = vand.u32 %v591, 65535
    %v678 = vshra.s32 %v591, 16
    %v679 = vcvt.s32.f32 %v677
    %v680 = vcvt.s32.f32 %v678
    %681 = vmax.xlane.f32.xlu0 %v680
    %v682 = vpop.xlane.xlu0 %681
    %vm683 = vcmp.eq.f32.partialorder %v680, %v682
    %v684 = vsel %vm683, %v679, -inf
    %685 = vmax.xlane.f32.xlu0 %v684
    %v686 = vpop.xlane.xlu0 %685
    %v687 = vcvt.f32.s32 %v686
    %v688 = vcvt.f32.s32 %v682
    %v689 = vshll.u32 %v688, 16
    %v690 = vadd.s32 %v689, %v687
    %v691 = vand.u32 %v592, 65535
    %v692 = vshra.s32 %v592, 16
    %v693 = vcvt.s32.f32 %v691
    %v694 = vcvt.s32.f32 %v692
    %695 = vmax.xlane.f32.xlu0 %v694
    %v696 = vpop.xlane.xlu0 %695
    %vm697 = vcmp.eq.f32.partialorder %v694, %v696
    %v698 = vsel %vm697, %v693, -inf
    %699 = vmax.xlane.f32.xlu0 %v698
    %v700 = vpop.xlane.xlu0 %699
    %v701 = vcvt.f32.s32 %v700
    %v702 = vcvt.f32.s32 %v696
    %v703 = vshll.u32 %v702, 16
    %v704 = vadd.s32 %v703, %v701
    %vm705 = vcmp.eq.s32.totalorder %v585, %v606
    %vm706 = vcmp.eq.s32.totalorder %v586, %v620
    %vm707 = vcmp.eq.s32.totalorder %v587, %v634
    %vm708 = vcmp.eq.s32.totalorder %v588, %v648
    %vm709 = vcmp.eq.s32.totalorder %v589, %v662
    %vm710 = vcmp.eq.s32.totalorder %v590, %v676
    %vm711 = vcmp.eq.s32.totalorder %v591, %v690
    %vm712 = vcmp.eq.s32.totalorder %v592, %v704
    %v713 = vsel %vm705, %v80, 128
    %v714 = vsel %vm706, %v80, 128
    %v715 = vsel %vm707, %v80, 128
    %v716 = vsel %vm708, %v80, 128
    %v717 = vsel %vm709, %v80, 128
    %v718 = vsel %vm710, %v80, 128
    %v719 = vsel %vm711, %v80, 128
    %v720 = vsel %vm712, %v80, 128
    %v721 = vand.u32 %v713, 65535
    %v722 = vshra.s32 %v713, 16
    %v723 = vcvt.s32.f32 %v721
    %v724 = vcvt.s32.f32 %v722
    %725 = vmin.xlane.f32.xlu0 %v724
    %v726 = vpop.xlane.xlu0 %725
    %vm727 = vcmp.eq.f32.partialorder %v724, %v726
    %v728 = vsel %vm727, %v723, inf
    %729 = vmin.xlane.f32.xlu0 %v728
    %v730 = vpop.xlane.xlu0 %729
    %v731 = vcvt.f32.s32 %v730
    %v732 = vcvt.f32.s32 %v726
    %v733 = vshll.u32 %v732, 16
    %v734 = vadd.s32 %v733, %v731
    %v735 = vand.u32 %v714, 65535
    %v736 = vshra.s32 %v714, 16
    %v737 = vcvt.s32.f32 %v735
    %v738 = vcvt.s32.f32 %v736
    %739 = vmin.xlane.f32.xlu0 %v738
    %v740 = vpop.xlane.xlu0 %739
    %vm741 = vcmp.eq.f32.partialorder %v738, %v740
    %v742 = vsel %vm741, %v737, inf
    %743 = vmin.xlane.f32.xlu0 %v742
    %v744 = vpop.xlane.xlu0 %743
    %v745 = vcvt.f32.s32 %v744
    %v746 = vcvt.f32.s32 %v740
    %v747 = vshll.u32 %v746, 16
    %v748 = vadd.s32 %v747, %v745
    %v749 = vand.u32 %v715, 65535
    %v750 = vshra.s32 %v715, 16
    %v751 = vcvt.s32.f32 %v749
    %v752 = vcvt.s32.f32 %v750
    %753 = vmin.xlane.f32.xlu0 %v752
    %v754 = vpop.xlane.xlu0 %753
    %vm755 = vcmp.eq.f32.partialorder %v752, %v754
    %v756 = vsel %vm755, %v751, inf
    %757 = vmin.xlane.f32.xlu0 %v756
    %v758 = vpop.xlane.xlu0 %757
    %v759 = vcvt.f32.s32 %v758
    %v760 = vcvt.f32.s32 %v754
    %v761 = vshll.u32 %v760, 16
    %v762 = vadd.s32 %v761, %v759
    %v763 = vand.u32 %v716, 65535
    %v764 = vshra.s32 %v716, 16
    %v765 = vcvt.s32.f32 %v763
    %v766 = vcvt.s32.f32 %v764
    %767 = vmin.xlane.f32.xlu0 %v766
    %v768 = vpop.xlane.xlu0 %767
    %vm769 = vcmp.eq.f32.partialorder %v766, %v768
    %v770 = vsel %vm769, %v765, inf
    %771 = vmin.xlane.f32.xlu0 %v770
    %v772 = vpop.xlane.xlu0 %771
    %v773 = vcvt.f32.s32 %v772
    %v774 = vcvt.f32.s32 %v768
    %v775 = vshll.u32 %v774, 16
    %v776 = vadd.s32 %v775, %v773
    %v777 = vand.u32 %v717, 65535
    %v778 = vshra.s32 %v717, 16
    %v779 = vcvt.s32.f32 %v777
    %v780 = vcvt.s32.f32 %v778
    %781 = vmin.xlane.f32.xlu0 %v780
    %v782 = vpop.xlane.xlu0 %781
    %vm783 = vcmp.eq.f32.partialorder %v780, %v782
    %v784 = vsel %vm783, %v779, inf
    %785 = vmin.xlane.f32.xlu0 %v784
    %v786 = vpop.xlane.xlu0 %785
    %v787 = vcvt.f32.s32 %v786
    %v788 = vcvt.f32.s32 %v782
    %v789 = vshll.u32 %v788, 16
    %v790 = vadd.s32 %v789, %v787
    %v791 = vand.u32 %v718, 65535
    %v792 = vshra.s32 %v718, 16
    %v793 = vcvt.s32.f32 %v791
    %v794 = vcvt.s32.f32 %v792
    %795 = vmin.xlane.f32.xlu0 %v794
    %v796 = vpop.xlane.xlu0 %795
    %vm797 = vcmp.eq.f32.partialorder %v794, %v796
    %v798 = vsel %vm797, %v793, inf
    %799 = vmin.xlane.f32.xlu0 %v798
    %v800 = vpop.xlane.xlu0 %799
    %v801 = vcvt.f32.s32 %v800
    %v802 = vcvt.f32.s32 %v796
    %v803 = vshll.u32 %v802, 16
    %v804 = vadd.s32 %v803, %v801
    %v805 = vand.u32 %v719, 65535
    %v806 = vshra.s32 %v719, 16
    %v807 = vcvt.s32.f32 %v805
    %v808 = vcvt.s32.f32 %v806
    %809 = vmin.xlane.f32.xlu0 %v808
    %v810 = vpop.xlane.xlu0 %809
    %vm811 = vcmp.eq.f32.partialorder %v808, %v810
    %v812 = vsel %vm811, %v807, inf
    %813 = vmin.xlane.f32.xlu0 %v812
    %v814 = vpop.xlane.xlu0 %813
    %v815 = vcvt.f32.s32 %v814
    %v816 = vcvt.f32.s32 %v810
    %v817 = vshll.u32 %v816, 16
    %v818 = vadd.s32 %v817, %v815
    %v819 = vand.u32 %v720, 65535
    %v820 = vshra.s32 %v720, 16
    %v821 = vcvt.s32.f32 %v819
    %v822 = vcvt.s32.f32 %v820
    %823 = vmin.xlane.f32.xlu0 %v822
    %v824 = vpop.xlane.xlu0 %823
    %vm825 = vcmp.eq.f32.partialorder %v822, %v824
    %v826 = vsel %vm825, %v821, inf
    %827 = vmin.xlane.f32.xlu0 %v826
    %v828 = vpop.xlane.xlu0 %827
    %v829 = vcvt.f32.s32 %v828
    %v830 = vcvt.f32.s32 %v824
    %v831 = vshll.u32 %v830, 16
    %v832 = vadd.s32 %v831, %v829
    %vm833 = vcmp.eq.s32.totalorder %v80, %v734
    %vm834 = vcmp.eq.s32.totalorder %v80, %v748
    %vm835 = vcmp.eq.s32.totalorder %v80, %v762
    %vm836 = vcmp.eq.s32.totalorder %v80, %v776
    %vm837 = vcmp.eq.s32.totalorder %v80, %v790
    %vm838 = vcmp.eq.s32.totalorder %v80, %v804
    %vm839 = vcmp.eq.s32.totalorder %v80, %v818
    %vm840 = vcmp.eq.s32.totalorder %v80, %v832
    %v841 = vsel %vm833, 2147483648, %v585
    %v842 = vsel %vm834, 2147483648, %v586
    %v843 = vsel %vm835, 2147483648, %v587
    %v844 = vsel %vm836, 2147483648, %v588
    %v845 = vsel %vm837, 2147483648, %v589
    %v846 = vsel %vm838, 2147483648, %v590
    %v847 = vsel %vm839, 2147483648, %v591
    %v848 = vsel %vm840, 2147483648, %v592
    %v849 = vand.u32 %v841, 65535
    %v850 = vshra.s32 %v841, 16
    %v851 = vcvt.s32.f32 %v849
    %v852 = vcvt.s32.f32 %v850
    %853 = vmax.xlane.f32.xlu0 %v852
    %v854 = vpop.xlane.xlu0 %853
    %vm855 = vcmp.eq.f32.partialorder %v852, %v854
    %v856 = vsel %vm855, %v851, -inf
    %857 = vmax.xlane.f32.xlu0 %v856
    %v858 = vpop.xlane.xlu0 %857
    %v859 = vcvt.f32.s32 %v858
    %v860 = vcvt.f32.s32 %v854
    %v861 = vshll.u32 %v860, 16
    %v862 = vadd.s32 %v861, %v859
    %v863 = vand.u32 %v842, 65535
    %v864 = vshra.s32 %v842, 16
    %v865 = vcvt.s32.f32 %v863
    %v866 = vcvt.s32.f32 %v864
    %867 = vmax.xlane.f32.xlu0 %v866
    %v868 = vpop.xlane.xlu0 %867
    %vm869 = vcmp.eq.f32.partialorder %v866, %v868
    %v870 = vsel %vm869, %v865, -inf
    %871 = vmax.xlane.f32.xlu0 %v870
    %v872 = vpop.xlane.xlu0 %871
    %v873 = vcvt.f32.s32 %v872
    %v874 = vcvt.f32.s32 %v868
    %v875 = vshll.u32 %v874, 16
    %v876 = vadd.s32 %v875, %v873
    %v877 = vand.u32 %v843, 65535
    %v878 = vshra.s32 %v843, 16
    %v879 = vcvt.s32.f32 %v877
    %v880 = vcvt.s32.f32 %v878
    %881 = vmax.xlane.f32.xlu0 %v880
    %v882 = vpop.xlane.xlu0 %881
    %vm883 = vcmp.eq.f32.partialorder %v880, %v882
    %v884 = vsel %vm883, %v879, -inf
    %885 = vmax.xlane.f32.xlu0 %v884
    %v886 = vpop.xlane.xlu0 %885
    %v887 = vcvt.f32.s32 %v886
    %v888 = vcvt.f32.s32 %v882
    %v889 = vshll.u32 %v888, 16
    %v890 = vadd.s32 %v889, %v887
    %v891 = vand.u32 %v844, 65535
    %v892 = vshra.s32 %v844, 16
    %v893 = vcvt.s32.f32 %v891
    %v894 = vcvt.s32.f32 %v892
    %895 = vmax.xlane.f32.xlu0 %v894
    %v896 = vpop.xlane.xlu0 %895
    %vm897 = vcmp.eq.f32.partialorder %v894, %v896
    %v898 = vsel %vm897, %v893, -inf
    %899 = vmax.xlane.f32.xlu0 %v898
    %v900 = vpop.xlane.xlu0 %899
    %v901 = vcvt.f32.s32 %v900
    %v902 = vcvt.f32.s32 %v896
    %v903 = vshll.u32 %v902, 16
    %v904 = vadd.s32 %v903, %v901
    %v905 = vand.u32 %v845, 65535
    %v906 = vshra.s32 %v845, 16
    %v907 = vcvt.s32.f32 %v905
    %v908 = vcvt.s32.f32 %v906
    %909 = vmax.xlane.f32.xlu0 %v908
    %v910 = vpop.xlane.xlu0 %909
    %vm911 = vcmp.eq.f32.partialorder %v908, %v910
    %v912 = vsel %vm911, %v907, -inf
    %913 = vmax.xlane.f32.xlu0 %v912
    %v914 = vpop.xlane.xlu0 %913
    %v915 = vcvt.f32.s32 %v914
    %v916 = vcvt.f32.s32 %v910
    %v917 = vshll.u32 %v916, 16
    %v918 = vadd.s32 %v917, %v915
    %v919 = vand.u32 %v846, 65535
    %v920 = vshra.s32 %v846, 16
    %v921 = vcvt.s32.f32 %v919
    %v922 = vcvt.s32.f32 %v920
    %923 = vmax.xlane.f32.xlu0 %v922
    %v924 = vpop.xlane.xlu0 %923
    %vm925 = vcmp.eq.f32.partialorder %v922, %v924
    %v926 = vsel %vm925, %v921, -inf
    %927 = vmax.xlane.f32.xlu0 %v926
    %v928 = vpop.xlane.xlu0 %927
    %v929 = vcvt.f32.s32 %v928
    %v930 = vcvt.f32.s32 %v924
    %v931 = vshll.u32 %v930, 16
    %v932 = vadd.s32 %v931, %v929
    %v933 = vand.u32 %v847, 65535
    %v934 = vshra.s32 %v847, 16
    %v935 = vcvt.s32.f32 %v933
    %v936 = vcvt.s32.f32 %v934
    %937 = vmax.xlane.f32.xlu0 %v936
    %v938 = vpop.xlane.xlu0 %937
    %vm939 = vcmp.eq.f32.partialorder %v936, %v938
    %v940 = vsel %vm939, %v935, -inf
    %941 = vmax.xlane.f32.xlu0 %v940
    %v942 = vpop.xlane.xlu0 %941
    %v943 = vcvt.f32.s32 %v942
    %v944 = vcvt.f32.s32 %v938
    %v945 = vshll.u32 %v944, 16
    %v946 = vadd.s32 %v945, %v943
    %v947 = vand.u32 %v848, 65535
    %v948 = vshra.s32 %v848, 16
    %v949 = vcvt.s32.f32 %v947
    %v950 = vcvt.s32.f32 %v948
    %951 = vmax.xlane.f32.xlu0 %v950
    %v952 = vpop.xlane.xlu0 %951
    %vm953 = vcmp.eq.f32.partialorder %v950, %v952
    %v954 = vsel %vm953, %v949, -inf
    %955 = vmax.xlane.f32.xlu0 %v954
    %v956 = vpop.xlane.xlu0 %955
    %v957 = vcvt.f32.s32 %v956
    %v958 = vcvt.f32.s32 %v952
    %v959 = vshll.u32 %v958, 16
    %v960 = vadd.s32 %v959, %v957
    %vm961 = vcmp.eq.s32.totalorder %v841, %v862
    %vm962 = vcmp.eq.s32.totalorder %v842, %v876
    %vm963 = vcmp.eq.s32.totalorder %v843, %v890
    %vm964 = vcmp.eq.s32.totalorder %v844, %v904
    %vm965 = vcmp.eq.s32.totalorder %v845, %v918
    %vm966 = vcmp.eq.s32.totalorder %v846, %v932
    %vm967 = vcmp.eq.s32.totalorder %v847, %v946
    %vm968 = vcmp.eq.s32.totalorder %v848, %v960
    %v969 = vsel %vm961, %v80, 128
    %v970 = vsel %vm962, %v80, 128
    %v971 = vsel %vm963, %v80, 128
    %v972 = vsel %vm964, %v80, 128
    %v973 = vsel %vm965, %v80, 128
    %v974 = vsel %vm966, %v80, 128
    %v975 = vsel %vm967, %v80, 128
    %v976 = vsel %vm968, %v80, 128
    %v977 = vand.u32 %v969, 65535
    %v978 = vshra.s32 %v969, 16
    %v979 = vcvt.s32.f32 %v977
    %v980 = vcvt.s32.f32 %v978
    %981 = vmin.xlane.f32.xlu0 %v980
    %v982 = vpop.xlane.xlu0 %981
    %vm983 = vcmp.eq.f32.partialorder %v980, %v982
    %v984 = vsel %vm983, %v979, inf
    %985 = vmin.xlane.f32.xlu0 %v984
    %v986 = vpop.xlane.xlu0 %985
    %v987 = vcvt.f32.s32 %v986
    %v988 = vcvt.f32.s32 %v982
    %v989 = vshll.u32 %v988, 16
    %v990 = vadd.s32 %v989, %v987
    %v991 = vand.u32 %v970, 65535
    %v992 = vshra.s32 %v970, 16
    %v993 = vcvt.s32.f32 %v991
    %v994 = vcvt.s32.f32 %v992
    %995 = vmin.xlane.f32.xlu0 %v994
    %v996 = vpop.xlane.xlu0 %995
    %vm997 = vcmp.eq.f32.partialorder %v994, %v996
    %v998 = vsel %vm997, %v993, inf
    %999 = vmin.xlane.f32.xlu0 %v998
    %v1000 = vpop.xlane.xlu0 %999
    %v1001 = vcvt.f32.s32 %v1000
    %v1002 = vcvt.f32.s32 %v996
    %v1003 = vshll.u32 %v1002, 16
    %v1004 = vadd.s32 %v1003, %v1001
    %v1005 = vand.u32 %v971, 65535
    %v1006 = vshra.s32 %v971, 16
    %v1007 = vcvt.s32.f32 %v1005
    %v1008 = vcvt.s32.f32 %v1006
    %1009 = vmin.xlane.f32.xlu0 %v1008
    %v1010 = vpop.xlane.xlu0 %1009
    %vm1011 = vcmp.eq.f32.partialorder %v1008, %v1010
    %v1012 = vsel %vm1011, %v1007, inf
    %1013 = vmin.xlane.f32.xlu0 %v1012
    %v1014 = vpop.xlane.xlu0 %1013
    %v1015 = vcvt.f32.s32 %v1014
    %v1016 = vcvt.f32.s32 %v1010
    %v1017 = vshll.u32 %v1016, 16
    %v1018 = vadd.s32 %v1017, %v1015
    %v1019 = vand.u32 %v972, 65535
    %v1020 = vshra.s32 %v972, 16
    %v1021 = vcvt.s32.f32 %v1019
    %v1022 = vcvt.s32.f32 %v1020
    %1023 = vmin.xlane.f32.xlu0 %v1022
    %v1024 = vpop.xlane.xlu0 %1023
    %vm1025 = vcmp.eq.f32.partialorder %v1022, %v1024
    %v1026 = vsel %vm1025, %v1021, inf
    %1027 = vmin.xlane.f32.xlu0 %v1026
    %v1028 = vpop.xlane.xlu0 %1027
    %v1029 = vcvt.f32.s32 %v1028
    %v1030 = vcvt.f32.s32 %v1024
    %v1031 = vshll.u32 %v1030, 16
    %v1032 = vadd.s32 %v1031, %v1029
    %v1033 = vand.u32 %v973, 65535
    %v1034 = vshra.s32 %v973, 16
    %v1035 = vcvt.s32.f32 %v1033
    %v1036 = vcvt.s32.f32 %v1034
    %1037 = vmin.xlane.f32.xlu0 %v1036
    %v1038 = vpop.xlane.xlu0 %1037
    %vm1039 = vcmp.eq.f32.partialorder %v1036, %v1038
    %v1040 = vsel %vm1039, %v1035, inf
    %1041 = vmin.xlane.f32.xlu0 %v1040
    %v1042 = vpop.xlane.xlu0 %1041
    %v1043 = vcvt.f32.s32 %v1042
    %v1044 = vcvt.f32.s32 %v1038
    %v1045 = vshll.u32 %v1044, 16
    %v1046 = vadd.s32 %v1045, %v1043
    %v1047 = vand.u32 %v974, 65535
    %v1048 = vshra.s32 %v974, 16
    %v1049 = vcvt.s32.f32 %v1047
    %v1050 = vcvt.s32.f32 %v1048
    %1051 = vmin.xlane.f32.xlu0 %v1050
    %v1052 = vpop.xlane.xlu0 %1051
    %vm1053 = vcmp.eq.f32.partialorder %v1050, %v1052
    %v1054 = vsel %vm1053, %v1049, inf
    %1055 = vmin.xlane.f32.xlu0 %v1054
    %v1056 = vpop.xlane.xlu0 %1055
    %v1057 = vcvt.f32.s32 %v1056
    %v1058 = vcvt.f32.s32 %v1052
    %v1059 = vshll.u32 %v1058, 16
    %v1060 = vadd.s32 %v1059, %v1057
    %v1061 = vand.u32 %v975, 65535
    %v1062 = vshra.s32 %v975, 16
    %v1063 = vcvt.s32.f32 %v1061
    %v1064 = vcvt.s32.f32 %v1062
    %1065 = vmin.xlane.f32.xlu0 %v1064
    %v1066 = vpop.xlane.xlu0 %1065
    %vm1067 = vcmp.eq.f32.partialorder %v1064, %v1066
    %v1068 = vsel %vm1067, %v1063, inf
    %1069 = vmin.xlane.f32.xlu0 %v1068
    %v1070 = vpop.xlane.xlu0 %1069
    %v1071 = vcvt.f32.s32 %v1070
    %v1072 = vcvt.f32.s32 %v1066
    %v1073 = vshll.u32 %v1072, 16
    %v1074 = vadd.s32 %v1073, %v1071
    %v1075 = vand.u32 %v976, 65535
    %v1076 = vshra.s32 %v976, 16
    %v1077 = vcvt.s32.f32 %v1075
    %v1078 = vcvt.s32.f32 %v1076
    %1079 = vmin.xlane.f32.xlu0 %v1078
    %v1080 = vpop.xlane.xlu0 %1079
    %vm1081 = vcmp.eq.f32.partialorder %v1078, %v1080
    %v1082 = vsel %vm1081, %v1077, inf
    %1083 = vmin.xlane.f32.xlu0 %v1082
    %v1084 = vpop.xlane.xlu0 %1083
    %v1085 = vcvt.f32.s32 %v1084
    %v1086 = vcvt.f32.s32 %v1080
    %v1087 = vshll.u32 %v1086, 16
    %v1088 = vadd.s32 %v1087, %v1085
    %vm1089 = vcmask 7168
    %v1090 = vsel %vm1089, %v94, %v350
    %v1091 = vsel %vm1089, %v108, %v364
    %v1092 = vsel %vm1089, %v122, %v378
    %v1093 = vsel %vm1089, %v136, %v392
    %v1094 = vsel %vm1089, %v150, %v406
    %v1095 = vsel %vm1089, %v164, %v420
    %v1096 = vsel %vm1089, %v178, %v434
    %v1097 = vsel %vm1089, %v192, %v448
    %vm1098 = vcmask 15360
    %v1099 = vsel %vm1098, %v1090, %v606
    %v1100 = vsel %vm1098, %v1091, %v620
    %v1101 = vsel %vm1098, %v1092, %v634
    %v1102 = vsel %vm1098, %v1093, %v648
    %v1103 = vsel %vm1098, %v1094, %v662
    %v1104 = vsel %vm1098, %v1095, %v676
    %v1105 = vsel %vm1098, %v1096, %v690
    %v1106 = vsel %vm1098, %v1097, %v704
    %vm1107 = vcmask 23552
    %v1108 = vsel %vm1107, %v1099, %v862
    %v1109 = vsel %vm1107, %v1100, %v876
    %v1110 = vsel %vm1107, %v1101, %v890
    %v1111 = vsel %vm1107, %v1102, %v904
    %v1112 = vsel %vm1107, %v1103, %v918
    %v1113 = vsel %vm1107, %v1104, %v932
    %v1114 = vsel %vm1107, %v1105, %v946
    %v1115 = vsel %vm1107, %v1106, %v960
    %v1116 = vsel %vm1089, %v222, %v478
    %v1117 = vsel %vm1089, %v236, %v492
    %v1118 = vsel %vm1089, %v250, %v506
    %v1119 = vsel %vm1089, %v264, %v520
    %v1120 = vsel %vm1089, %v278, %v534
    %v1121 = vsel %vm1089, %v292, %v548
    %v1122 = vsel %vm1089, %v306, %v562
    %v1123 = vsel %vm1089, %v320, %v576
    %v1124 = vsel %vm1098, %v1116, %v734
    %v1125 = vsel %vm1098, %v1117, %v748
    %v1126 = vsel %vm1098, %v1118, %v762
    %v1127 = vsel %vm1098, %v1119, %v776
    %v1128 = vsel %vm1098, %v1120, %v790
    %v1129 = vsel %vm1098, %v1121, %v804
    %v1130 = vsel %vm1098, %v1122, %v818
    %v1131 = vsel %vm1098, %v1123, %v832
    %v1132 = vsel %vm1107, %v1124, %v990
    %v1133 = vsel %vm1107, %v1125, %v1004
    %v1134 = vsel %vm1107, %v1126, %v1018
    %v1135 = vsel %vm1107, %v1127, %v1032
    %v1136 = vsel %vm1107, %v1128, %v1046
    %v1137 = vsel %vm1107, %v1129, %v1060
    %v1138 = vsel %vm1107, %v1130, %v1074
    %v1139 = vsel %vm1107, %v1131, %v1088
    %vm1140 = vcmp.lt.s32.totalorder %v1108, 0
    %vm1141 = vcmp.lt.s32.totalorder %v1109, 0
    %vm1142 = vcmp.lt.s32.totalorder %v1110, 0
    %vm1143 = vcmp.lt.s32.totalorder %v1111, 0
    %vm1144 = vcmp.lt.s32.totalorder %v1112, 0
    %vm1145 = vcmp.lt.s32.totalorder %v1113, 0
    %vm1146 = vcmp.lt.s32.totalorder %v1114, 0
    %vm1147 = vcmp.lt.s32.totalorder %v1115, 0
    %v1148 = vxor.u32 %v1108, 2147483648
    %v1149 = vxor.u32 %v1109, 2147483648
    %v1150 = vxor.u32 %v1110, 2147483648
    %v1151 = vxor.u32 %v1111, 2147483648
    %v1152 = vxor.u32 %v1112, 2147483648
    %v1153 = vxor.u32 %v1113, 2147483648
    %v1154 = vxor.u32 %v1114, 2147483648
    %v1155 = vxor.u32 %v1115, 2147483648
    %v1156 = vxor.u32 %v1148, 4294967295
    %v1157 = vxor.u32 %v1149, 4294967295
    %v1158 = vxor.u32 %v1150, 4294967295
    %v1159 = vxor.u32 %v1151, 4294967295
    %v1160 = vxor.u32 %v1152, 4294967295
    %v1161 = vxor.u32 %v1153, 4294967295
    %v1162 = vxor.u32 %v1154, 4294967295
    %v1163 = vxor.u32 %v1155, 4294967295
    %v1164 = vsel %vm1140, %v1156, %v1108
    %v1165 = vsel %vm1141, %v1157, %v1109
    %v1166 = vsel %vm1142, %v1158, %v1110
    %v1167 = vsel %vm1143, %v1159, %v1111
    %v1168 = vsel %vm1144, %v1160, %v1112
    %v1169 = vsel %vm1145, %v1161, %v1113
    %v1170 = vsel %vm1146, %v1162, %v1114
    %v1171 = vsel %vm1147, %v1163, %v1115
    %1172 = vrot.lane.b32.xlu0 %v1132, 4
    %v1173 = vpop.permute.xlu0 %1172
    %1174 = vrot.lane.b32.xlu0 %v1133, 4
    %v1175 = vpop.permute.xlu0 %1174
    %1176 = vrot.lane.b32.xlu0 %v1134, 4
    %v1177 = vpop.permute.xlu0 %1176
    %1178 = vrot.lane.b32.xlu0 %v1135, 4
    %v1179 = vpop.permute.xlu0 %1178
    %1180 = vrot.lane.b32.xlu0 %v1136, 4
    %v1181 = vpop.permute.xlu0 %1180
    %1182 = vrot.lane.b32.xlu0 %v1137, 4
    %v1183 = vpop.permute.xlu0 %1182
    %1184 = vrot.lane.b32.xlu0 %v1138, 4
    %v1185 = vpop.permute.xlu0 %1184
    %1186 = vrot.lane.b32.xlu0 %v1139, 4
    %v1187 = vpop.permute.xlu0 %1186
    %vm1188 = vcmask 31744
    %v1189 = vsel %vm1188, %v1164, %v1173
    %v1190 = vsel %vm1188, %v1165, %v1175
    %v1191 = vsel %vm1188, %v1166, %v1177
    %v1192 = vsel %vm1188, %v1167, %v1179
    %v1193 = vsel %vm1188, %v1168, %v1181
    %v1194 = vsel %vm1188, %v1169, %v1183
    %v1195 = vsel %vm1188, %v1170, %v1185
    %v1196 = vsel %vm1188, %v1171, %v1187
    %vm1197 = vcmask 64512
    %1198 = vst.msk [vmem:[#allocation5] sm:$0xff] %vm1197, %v1189
    %1199 = vst.msk [vmem:[#allocation5 + $0x8] sm:$0xff] %vm1197, %v1190
    %1200 = vst.msk [vmem:[#allocation5 + $0x10] sm:$0xff] %vm1197, %v1191
    %1201 = vst.msk [vmem:[#allocation5 + $0x18] sm:$0xff] %vm1197, %v1192
    %1202 = vst.msk [vmem:[#allocation5 + $0x20] sm:$0xff] %vm1197, %v1193
    %1203 = vst.msk [vmem:[#allocation5 + $0x28] sm:$0xff] %vm1197, %v1194
    %1204 = vst.msk [vmem:[#allocation5 + $0x30] sm:$0xff] %vm1197, %v1195
    %1205 = vst.msk [vmem:[#allocation5 + $0x38] sm:$0xff] %vm1197, %v1196
    // Predicated region
    $region10: #{tpu_custom_call.1} parent=1 // pred_check
      _
    $region11: #{tpu_custom_call.1} parent=1 // pred_check_branch
      %1207 = sbr.rel (0) target = $region13
    $region12: #{tpu_custom_call.1} parent=1 // pred_region
      %s1209 = ssub.s32 1024, 1024
      %1210 = vsyncadd [#allocation4], %s1209
      %s1211 = sshll.u32 [#allocation5], 4
      %s1212 = int_to_ptr.vmem [resolvable:$true] %s1211
      %1217 = dma.vmem_to_hbm [thread:$0]  %s1212, 1024, %s1, [#allocation4], 128, 128, 8
    $region13: #{tpu_custom_call.1} parent=1 // pred_fallthru
      _
    // Predicated region
    $region14: #{tpu_custom_call.1} parent=1 // pred_check
      _
    $region15: #{tpu_custom_call.1} parent=1 // pred_check_branch
      %1219 = sbr.rel (0) target = $region17
    $region16: #{tpu_custom_call.1} parent=1 // pred_region
      %1220 = dma.done [#allocation4], 1024
    $region17: #{tpu_custom_call.1} parent=1 // pred_fallthru
      _
    %1221 = vsyncpa [#allocation3], 1
    %1222 = vsyncpa [#allocation4], 1

</llo_original>
